<compile_context>
chip_gen: v6e
topology: v6e:2x2x1
jax: 0.10.0
libtpu: 0.0.40
codegen_flags: <defaults>
</compile_context>

<pallas_src>
import math

import jax
import jax.numpy as jnp
from jax import lax
from jax.experimental import pallas as pl
from jax.experimental.pallas import tpu as pltpu

SEQ_LEN = 64
D_MODEL = 64
K_DIM = 16
# nn.RMSNorm(eps=None) resolves to finfo(input.dtype).eps at runtime; we fix a small eps
# and use the identical value in kernel and reference.
RMS_EPS = 1e-6


# ----------------------------- parameter construction -----------------------------
def get_hankel(seq_len: int, use_hankel_L: bool = False) -> jnp.ndarray:
    entries = jnp.arange(1, seq_len + 1, dtype=jnp.float32)
    i_plus_j = entries[:, None] + entries[None, :]
    if use_hankel_L:
        sgn = (-1.0) ** (i_plus_j - 2.0) + 1.0
        denom = (i_plus_j + 3.0) * (i_plus_j - 1.0) * (i_plus_j + 1.0)
        return sgn * (8.0 / denom)
    return 2.0 / (i_plus_j ** 3 - i_plus_j)


def get_spectral_filters(seq_len: int, K: int, use_hankel_L: bool = False) -> jnp.ndarray:
    Z = get_hankel(seq_len, use_hankel_L)
    sigma, phi = jnp.linalg.eigh(Z)          # ascending, like torch.linalg.eigh
    sigma_k = jnp.maximum(sigma[-K:], 1e-9)
    return phi[:, -K:] * sigma_k ** 0.25


def _snap_bf16(a):
    # PyTorch module stores these params in bfloat16: snap to bf16-representable values
    # so kernel (bf16 operands) and reference (f32) use numerically identical weights.
    return a.astype(jnp.bfloat16).astype(jnp.float32)


def _init_linear(key, fan_in, fan_out):
    kw, kb = jax.random.split(key)
    bound = 1.0 / math.sqrt(fan_in)
    w = jax.random.uniform(kw, (fan_in, fan_out), jnp.float32, -bound, bound)
    b = jax.random.uniform(kb, (1, fan_out), jnp.float32, -bound, bound)
    return w, b


def init_params(key):
    kq, ko = jax.random.split(key)
    wq, bq = _init_linear(kq, SEQ_LEN, K_DIM)      # q_proj: Linear(seq_len -> k)
    wo, bo = _init_linear(ko, K_DIM, D_MODEL)      # o_proj: Linear(k -> d_model)
    filt = get_spectral_filters(SEQ_LEN, K_DIM)    # K and V filters share the same init
    L = jnp.tril(get_hankel(SEQ_LEN))
    p = dict(wq=wq, bq=bq, k_filt=filt, v_filt=filt, wo=wo, bo=bo, L=L)
    p = {name: _snap_bf16(v) for name, v in p.items()}
    p["g"] = jnp.ones((1, D_MODEL), jnp.float32)   # nn.RMSNorm weight (f32)
    return p


# ----------------------------------- kernel ---------------------------------------
def spectral_attention_kernel(x_ref, L_ref, wqkv_ref, bq_ref, wo_ref, bo_ref, g_ref, o_ref):
    bb, T, D = x_ref.shape
    M = bb * T

    # Fused Q/KF/VF projection: one (M, 64) @ (64, 48) bf16 MXU push, f32 accumulate.
    x2 = x_ref[...].reshape(M, D)                                     # bf16
    qkv = lax.dot_general(x2, wqkv_ref[...], (((1,), (0,)), ((), ())),
                          preferred_element_type=jnp.float32)          # (M, 3k) f32
    q = (qkv[:, :K_DIM] + bq_ref[...]).astype(jnp.bfloat16).reshape(bb, T, K_DIM)
    kf = qkv[:, K_DIM:2 * K_DIM].astype(jnp.bfloat16).reshape(bb, T, K_DIM)
    vf = qkv[:, 2 * K_DIM:].astype(jnp.bfloat16).reshape(bb, T, K_DIM)

    # Spectral "attention":  Y = (L ∘ (Q Vᵀ)) K_   (exact refactor of the einsum chain).
    A = lax.dot_general(q, vf, (((2,), (2,)), ((0,), (0,))),
                        preferred_element_type=jnp.float32)            # (bb, T, T)
    LA = (A * L_ref[...]).astype(jnp.bfloat16)                         # causal Hankel weights, f32 mul
    y = lax.dot_general(LA, kf, (((2,), (1,)), ((0,), (0,))),
                        preferred_element_type=jnp.float32)            # (bb, T, k)

    # Output projection + RMSNorm (norm math in f32; rsqrt uses the EUP slot).
    y2 = y.reshape(M, K_DIM).astype(jnp.bfloat16)
    out = lax.dot_general(y2, wo_ref[...], (((1,), (0,)), ((), ())),
                          preferred_element_type=jnp.float32) + bo_ref[...]   # (M, D)
    ms = jnp.mean(out * out, axis=-1, keepdims=True)
    out = out * lax.rsqrt(ms + RMS_EPS) * g_ref[...]
    o_ref[...] = out.reshape(bb, T, D).astype(o_ref.dtype)


def _pick_block_b(B, T, target_rows=256):
    """Sequences per grid step: maximize MXU rows while keeping >=2 parallel steps."""
    divisors = [d for d in range(1, B + 1) if B % d == 0]
    fits = [d for d in divisors if d * T <= target_rows]
    bb = max(fits) if fits else 1
    if B // bb < 2:                       # v7x has 2 TensorCores: keep >=2 parallel steps
        two_step = [d for d in divisors if B // d >= 2]
        if two_step:
            bb = max(two_step)
    return bb


def spectral_attention(x, params, block_b=None):
    B, T, D = x.shape
    assert T == SEQ_LEN and D == D_MODEL, "this config uses pre_proj = Identity (d_model == seq_len)"
    # TODO(synk): pre_proj Linear(d_model -> seq_len) for the d_model != seq_len case is not implemented.
    if block_b is None:
        block_b = _pick_block_b(B, T)
    assert B % block_b == 0
    grid = (B // block_b,)

    L = params["L"]
    wqkv = jnp.concatenate([params["wq"], params["k_filt"], params["v_filt"]],
                           axis=1).astype(jnp.bfloat16)                 # (64, 48)
    wo = params["wo"].astype(jnp.bfloat16)
    bq, bo, g = params["bq"], params["bo"], params["g"]

    def full_spec(a):
        nd = a.ndim
        return pl.BlockSpec(a.shape, lambda b, _nd=nd: (0,) * _nd)

    return pl.pallas_call(
        spectral_attention_kernel,
        out_shape=jax.ShapeDtypeStruct((B, T, D), jnp.float32),
        grid=grid,
        in_specs=[pl.BlockSpec((block_b, T, D), lambda b: (b, 0, 0)),
                  full_spec(L), full_spec(wqkv), full_spec(bq),
                  full_spec(wo), full_spec(bo), full_spec(g)],
        out_specs=pl.BlockSpec((block_b, T, D), lambda b: (b, 0, 0)),
        compiler_params=pltpu.CompilerParams(dimension_semantics=("parallel",)),
    )(x.astype(jnp.bfloat16), L, wqkv, bq, wo, bo, g)


# --------------------- pure-JAX reference (original einsum chain, f32) ---------------------
def spectral_attention_ref(x, p):
    xp = x                                                 # pre_proj == Identity
    Q = xp @ p["wq"] + p["bq"]                             # (B, T, k)
    K_ = jnp.einsum("bti,ik->btk", xp, p["k_filt"])
    V_ = jnp.einsum("bti,ik->btk", xp, p["v_filt"])
    Z = jnp.einsum("btp,btn->btpn", V_, K_)                # (B, T, k, k)
    H = jnp.einsum("ts,bspn->btpn", p["L"], Z)
    Y = jnp.einsum("btk,btkn->btn", Q, H)
    out = Y @ p["wo"] + p["bo"]
    ms = jnp.mean(out * out, axis=-1, keepdims=True)
    return out * lax.rsqrt(ms + RMS_EPS) * p["g"]


if __name__ == "__main__":
    key = jax.random.PRNGKey(0)
    kx, kp = jax.random.split(key)
    B = 2
    x = _snap_bf16(jax.random.normal(kx, (B, SEQ_LEN, D_MODEL), jnp.float32))
    params = init_params(kp)

    out = jax.block_until_ready(spectral_attention(x, params))
    ref = spectral_attention_ref(x, params)

    assert out.shape == (B, SEQ_LEN, D_MODEL)
    max_err = float(jnp.max(jnp.abs(out - ref)))
    # bf16 MXU operands vs f32 reference -> relaxed tolerance (per review guidance).
    assert jnp.allclose(out, ref, atol=5e-2, rtol=5e-2), f"mismatch vs reference (max abs err {max_err:.4f})"
    print("KERNEL_OK")
</pallas_src>

<mosaic_0001>
module attributes {stable_mosaic.version = 11 : i64} {
  func.func @spectral_attention_kernel(%arg0: i32, %arg1: memref<1x64x64xbf16, #tpu.memory_space<vmem>>, %arg2: memref<64x64xf32, #tpu.memory_space<vmem>>, %arg3: memref<64x48xbf16, #tpu.memory_space<vmem>>, %arg4: memref<1x16xf32, #tpu.memory_space<vmem>>, %arg5: memref<16x64xbf16, #tpu.memory_space<vmem>>, %arg6: memref<1x64xf32, #tpu.memory_space<vmem>>, %arg7: memref<1x64xf32, #tpu.memory_space<vmem>>, %arg8: memref<1x64x64xf32, #tpu.memory_space<vmem>>) attributes {dimension_semantics = [#tpu.dimension_semantics<parallel>], iteration_bounds = array<i64: 2>, scalar_prefetch = 0 : i64, scratch_operands = 0 : i64, tpu.core_type = #tpu.core_type<tc>, window_params = [{transform_indices = @transform_0, window_bounds = array<i64: 1, 64, 64>}, {pipeline_mode = #tpu.pipeline_mode<synchronous>, transform_indices = @transform_1, window_bounds = array<i64: 64, 64>}, {pipeline_mode = #tpu.pipeline_mode<synchronous>, transform_indices = @transform_2, window_bounds = array<i64: 64, 48>}, {pipeline_mode = #tpu.pipeline_mode<synchronous>, transform_indices = @transform_3, window_bounds = array<i64: 1, 16>}, {pipeline_mode = #tpu.pipeline_mode<synchronous>, transform_indices = @transform_4, window_bounds = array<i64: 16, 64>}, {pipeline_mode = #tpu.pipeline_mode<synchronous>, transform_indices = @transform_5, window_bounds = array<i64: 1, 64>}, {pipeline_mode = #tpu.pipeline_mode<synchronous>, transform_indices = @transform_6, window_bounds = array<i64: 1, 64>}, {transform_indices = @transform_7, window_bounds = array<i64: 1, 64, 64>}]} {
    %c0 = arith.constant 0 : index
    %c0_0 = arith.constant 0 : index
    %c0_1 = arith.constant 0 : index
    %0 = vector.load %arg1[%c0, %c0_0, %c0_1] : memref<1x64x64xbf16, #tpu.memory_space<vmem>>, vector<1x64x64xbf16>
    %1 = vector.shape_cast %0 : vector<1x64x64xbf16> to vector<64x64xbf16>
    %c0_2 = arith.constant 0 : index
    %c0_3 = arith.constant 0 : index
    %2 = vector.load %arg3[%c0_2, %c0_3] : memref<64x48xbf16, #tpu.memory_space<vmem>>, vector<64x48xbf16>
    %cst = arith.constant dense<0.000000e+00> : vector<64x48xf32>
    %3 = tpu.matmul %1, %2, %cst {dimension_numbers = #tpu.dot_dimension_numbers<[1], [0], [0], [1], [0, 0, 1, 1], [], []>} : vector<64x64xbf16>, vector<64x48xbf16>, vector<64x48xf32> -> vector<64x48xf32>
    %4 = vector.extract_strided_slice %3 {offsets = [0, 0], sizes = [64, 16], strides = [1, 1]} : vector<64x48xf32> to vector<64x16xf32>
    %c0_4 = arith.constant 0 : index
    %c0_5 = arith.constant 0 : index
    %5 = vector.load %arg4[%c0_4, %c0_5] : memref<1x16xf32, #tpu.memory_space<vmem>>, vector<1x16xf32>
    %6 = vector.broadcast %5 : vector<1x16xf32> to vector<64x16xf32>
    %7 = arith.addf %4, %6 : vector<64x16xf32>
    %8 = arith.truncf %7 : vector<64x16xf32> to vector<64x16xbf16>
    %9 = vector.shape_cast %8 : vector<64x16xbf16> to vector<1x64x16xbf16>
    %10 = vector.extract_strided_slice %3 {offsets = [0, 16], sizes = [64, 16], strides = [1, 1]} : vector<64x48xf32> to vector<64x16xf32>
    %11 = arith.truncf %10 : vector<64x16xf32> to vector<64x16xbf16>
    %12 = vector.shape_cast %11 : vector<64x16xbf16> to vector<1x64x16xbf16>
    %13 = vector.extract_strided_slice %3 {offsets = [0, 32], sizes = [64, 16], strides = [1, 1]} : vector<64x48xf32> to vector<64x16xf32>
    %14 = arith.truncf %13 : vector<64x16xf32> to vector<64x16xbf16>
    %15 = vector.shape_cast %14 : vector<64x16xbf16> to vector<1x64x16xbf16>
    %cst_6 = arith.constant dense<0.000000e+00> : vector<1x64x64xf32>
    %16 = tpu.matmul %9, %15, %cst_6 {dimension_numbers = #tpu.dot_dimension_numbers<[2], [2], [1], [1], [0, 0, 0, 1, 1, 1], [0], [0]>} : vector<1x64x16xbf16>, vector<1x64x16xbf16>, vector<1x64x64xf32> -> vector<1x64x64xf32>
    %c0_7 = arith.constant 0 : index
    %c0_8 = arith.constant 0 : index
    %17 = vector.load %arg2[%c0_7, %c0_8] : memref<64x64xf32, #tpu.memory_space<vmem>>, vector<64x64xf32>
    %18 = vector.shape_cast %17 : vector<64x64xf32> to vector<1x64x64xf32>
    %19 = arith.mulf %16, %18 : vector<1x64x64xf32>
    %20 = arith.truncf %19 : vector<1x64x64xf32> to vector<1x64x64xbf16>
    %cst_9 = arith.constant dense<0.000000e+00> : vector<1x64x16xf32>
    %21 = tpu.matmul %20, %12, %cst_9 {dimension_numbers = #tpu.dot_dimension_numbers<[2], [1], [1], [2], [0, 0, 0, 1, 1, 2], [0], [0]>} : vector<1x64x64xbf16>, vector<1x64x16xbf16>, vector<1x64x16xf32> -> vector<1x64x16xf32>
    %22 = vector.shape_cast %21 : vector<1x64x16xf32> to vector<64x16xf32>
    %23 = arith.truncf %22 : vector<64x16xf32> to vector<64x16xbf16>
    %c0_10 = arith.constant 0 : index
    %c0_11 = arith.constant 0 : index
    %24 = vector.load %arg5[%c0_10, %c0_11] : memref<16x64xbf16, #tpu.memory_space<vmem>>, vector<16x64xbf16>
    %cst_12 = arith.constant dense<0.000000e+00> : vector<64x64xf32>
    %25 = tpu.matmul %23, %24, %cst_12 {dimension_numbers = #tpu.dot_dimension_numbers<[1], [0], [0], [1], [0, 0, 1, 1], [], []>} : vector<64x16xbf16>, vector<16x64xbf16>, vector<64x64xf32> -> vector<64x64xf32>
    %c0_13 = arith.constant 0 : index
    %c0_14 = arith.constant 0 : index
    %26 = vector.load %arg6[%c0_13, %c0_14] : memref<1x64xf32, #tpu.memory_space<vmem>>, vector<1x64xf32>
    %27 = vector.broadcast %26 : vector<1x64xf32> to vector<64x64xf32>
    %28 = arith.addf %25, %27 : vector<64x64xf32>
    %29 = arith.mulf %28, %28 : vector<64x64xf32>
    %cst_15 = arith.constant dense<0.000000e+00> : vector<64xf32>
    %30 = vector.multi_reduction <add>, %29, %cst_15 [1] : vector<64x64xf32> to vector<64xf32>
    %31 = vector.shape_cast %30 : vector<64xf32> to vector<64x1xf32>
    %cst_16 = arith.constant 6.400000e+01 : f32
    %32 = vector.broadcast %cst_16 : f32 to vector<64x1xf32>
    %33 = arith.divf %31, %32 : vector<64x1xf32>
    %cst_17 = arith.constant 9.99999997E-7 : f32
    %34 = vector.broadcast %cst_17 : f32 to vector<64x1xf32>
    %35 = arith.addf %33, %34 : vector<64x1xf32>
    %36 = math.rsqrt %35 : vector<64x1xf32>
    %37 = vector.broadcast %36 : vector<64x1xf32> to vector<64x64xf32>
    %38 = arith.mulf %28, %37 : vector<64x64xf32>
    %c0_18 = arith.constant 0 : index
    %c0_19 = arith.constant 0 : index
    %39 = vector.load %arg7[%c0_18, %c0_19] : memref<1x64xf32, #tpu.memory_space<vmem>>, vector<1x64xf32>
    %40 = vector.broadcast %39 : vector<1x64xf32> to vector<64x64xf32>
    %41 = arith.mulf %38, %40 : vector<64x64xf32>
    %42 = vector.shape_cast %41 : vector<64x64xf32> to vector<1x64x64xf32>
    %c0_20 = arith.constant 0 : index
    %c0_21 = arith.constant 0 : index
    %c0_22 = arith.constant 0 : index
    %43 = vector.load %arg8[%c0_20, %c0_21, %c0_22] : memref<1x64x64xf32, #tpu.memory_space<vmem>>, vector<1x64x64xf32>
    tpu.vector_store %arg8[%c0_20, %c0_21, %c0_22], %42 {strides = array<i32>} : memref<1x64x64xf32, #tpu.memory_space<vmem>>, vector<1x64x64xf32>,
    return
  }
  func.func @transform_0(%arg0: i32) -> (i32, i32, i32) {
    %c0_i32 = arith.constant 0 : i32
    %c0_i32_0 = arith.constant 0 : i32
    %c0_i32_1 = arith.constant 0 : i32
    return %arg0, %c0_i32, %c0_i32_0 : i32, i32, i32
  }
  func.func @transform_1(%arg0: i32) -> (i32, i32) {
    %c0_i32 = arith.constant 0 : i32
    %c0_i32_0 = arith.constant 0 : i32
    %c0_i32_1 = arith.constant 0 : i32
    return %c0_i32, %c0_i32_0 : i32, i32
  }
  func.func @transform_2(%arg0: i32) -> (i32, i32) {
    %c0_i32 = arith.constant 0 : i32
    %c0_i32_0 = arith.constant 0 : i32
    %c0_i32_1 = arith.constant 0 : i32
    return %c0_i32, %c0_i32_0 : i32, i32
  }
  func.func @transform_3(%arg0: i32) -> (i32, i32) {
    %c0_i32 = arith.constant 0 : i32
    %c0_i32_0 = arith.constant 0 : i32
    %c0_i32_1 = arith.constant 0 : i32
    return %c0_i32, %c0_i32_0 : i32, i32
  }
  func.func @transform_4(%arg0: i32) -> (i32, i32) {
    %c0_i32 = arith.constant 0 : i32
    %c0_i32_0 = arith.constant 0 : i32
    %c0_i32_1 = arith.constant 0 : i32
    return %c0_i32, %c0_i32_0 : i32, i32
  }
  func.func @transform_5(%arg0: i32) -> (i32, i32) {
    %c0_i32 = arith.constant 0 : i32
    %c0_i32_0 = arith.constant 0 : i32
    %c0_i32_1 = arith.constant 0 : i32
    return %c0_i32, %c0_i32_0 : i32, i32
  }
  func.func @transform_6(%arg0: i32) -> (i32, i32) {
    %c0_i32 = arith.constant 0 : i32
    %c0_i32_0 = arith.constant 0 : i32
    %c0_i32_1 = arith.constant 0 : i32
    return %c0_i32, %c0_i32_0 : i32, i32
  }
  func.func @transform_7(%arg0: i32) -> (i32, i32, i32) {
    %c0_i32 = arith.constant 0 : i32
    %c0_i32_0 = arith.constant 0 : i32
    %c0_i32_1 = arith.constant 0 : i32
    return %arg0, %c0_i32, %c0_i32_0 : i32, i32, i32
  }
}

</mosaic_0001>

<llo_original>
// kernel: tpu_custom_call.1
$region0: #{tpu_custom_call.1}
  #allocation0 [shape = 'u32[]', space=smem, size = 0x4, offset = 0x4, fixed_abs, tag = 'smem constant byte address 0x4 - core index']
  #allocation1 [shape = 'u32[144,128]{1,0:T(1,128)}', space=vmem, size = 0x12000, scoped, tag = 'internal scratch']
  %s0 = inlined_call_operand.hbm [shape: bf16[2,64,64], index: 0, kind: input, shape index: {}]
  %s1 = inlined_call_operand.hbm [shape: f32[64,64], index: 1, kind: input, shape index: {}]
  %s2 = inlined_call_operand.vmem [shape: bf16[64,48], index: 2, kind: input, shape index: {}]
  %s3 = inlined_call_operand.vmem [shape: f32[1,16], index: 3, kind: input, shape index: {}]
  %s4 = inlined_call_operand.vmem [shape: bf16[16,64], index: 4, kind: input, shape index: {}]
  %s5 = inlined_call_operand.vmem [shape: f32[1,64], index: 5, kind: input, shape index: {}]
  %s6 = inlined_call_operand.vmem [shape: f32[1,64], index: 6, kind: input, shape index: {}]
  %s7 = inlined_call_operand.hbm [shape: f32[2,64,64], index: 7, kind: output, shape index: {}]
  %s8 = sld [smem:[#allocation0]]
  $region69: #{tpu_custom_call.1} parent=0
    _
  %s10 = ssub.s32 1, %s8
  %s11 = scalar_select 0, %s10, %s8
  $region1: #{tpu_custom_call.1} parent=0
    #allocation2 [shape = 'u8[32768]{0}', space=vmem, size = 0x8000, scoped, tag = 'input window, operand 0']
    #allocation3 [shape = 's32[2]{0}', space=sflag, size = 0x8, scoped, tag = 'scoped memory for tpu_custom_call.1']
    #allocation4 [shape = 's32[2]{0}', space=sflag, size = 0x8, scoped, tag = 'scoped memory for tpu_custom_call.1']
    #allocation5 [shape = 'u8[32768]{0}', space=vmem, size = 0x8000, scoped, tag = 'input window, operand 1, single buffered']
    #allocation6 [shape = 's32[1]{0}', space=sflag, size = 0x4, scoped, tag = 'scoped memory for tpu_custom_call.1']
    #allocation7 [shape = 'u8[65536]{0}', space=vmem, size = 0x10000, scoped, tag = 'output window, operand 0']
    %12 = vsyncpa [#allocation3], 0
    %s13 = scalar_lea.sflag [#allocation3], 1
    %14 = vsyncpa %s13, 0
    %15 = vsyncpa [#allocation6], 0
    %16 = vsyncpa [#allocation4], 0
    %s17 = scalar_lea.sflag [#allocation4], 1
    %18 = vsyncpa %s17, 0
    loop: start=0, step=1, limit=4
    $region2: #{tpu_custom_call.1} parent=1 // loop_pre_header
      _
    $region3: #{tpu_custom_call.1} parent=1 // loop_header
      %s20 = sphi 0, %s24
      %p21 = scmp.ge.s32.totalorder %s20, 4
      %s30 = sphi 0, %s32
      %s33 = sphi 0, %s30
      %s34 = sphi 0, %s33
      %s50 = sphi 0, %s34
      %s54 = sphi 0, %s54
      %s56 = sphi 0, %s54
      %s57 = sphi 0, %s56
      %s71 = sphi 0, %s57
      %s75 = sphi 0, %s75
      %s77 = sphi 0, %s75
      %s78 = sphi 0, %s77
      %s92 = sphi 0, %s78
      %s96 = sphi 0, %s96
      %s98 = sphi 0, %s96
      %s99 = sphi 0, %s98
      %s113 = sphi 0, %s99
      %s117 = sphi 0, %s117
      %s119 = sphi 0, %s117
      %s120 = sphi 0, %s119
      %s134 = sphi 0, %s120
      %s138 = sphi 0, %s138
      %s140 = sphi 0, %s138
      %s141 = sphi 0, %s140
      %s155 = sphi 0, %s141
      %s159 = sphi 0, %s159
      %s161 = sphi 0, %s159
      %s162 = sphi 0, %s161
      %s176 = sphi 0, %s162
      %s182 = sphi 0, %s184
      %s185 = sphi 0, %s182
      %s186 = sphi 0, %s185
      %s202 = sphi 0, %s186
    $region4: #{tpu_custom_call.1} parent=1 // loop_header_branch
      %23 = sbr.rel (%p21) target = $region8
    $region5: #{tpu_custom_call.1} parent=1 // loop_body
      %s25 = ssub.s32 %s20, 1
      %s26 = ssub.s32 %s20, 2
      %s27 = sadd.s32 %s20, 1
      %s28 = ssub.s32 %s20, %s27
      %p29 = scmp.eq.s32.totalorder %s28, 0
      %s31 = sadd.s32 %s30, 1
      %s32 = scalar_select %p29, %s30, %s31
      %p35 = pneg %p29
      %p36 = scmp.eq.s32.totalorder %s20, 1
      %p37 = por %p35, %p36
      %p38 = scmp.ne.s32.totalorder %s30, %s33
      %p39 = scmp.eq.s32.totalorder %s20, 0
      %p40 = por %p38, %p39
      %p41 = scmp.ne.s32.totalorder %s30, %s33
      %p42 = scmp.eq.s32.totalorder %s25, 1
      %p43 = por %p41, %p42
      %p44 = scmp.ne.s32.totalorder %s33, %s34
      %p45 = scmp.eq.s32.totalorder %s25, 0
      %p46 = por %p44, %p45
      %p47 = scmp.ne.s32.totalorder %s33, %s34
      %p48 = scmp.eq.s32.totalorder %s26, 1
      %p49 = por %p47, %p48
      %p51 = scmp.ne.s32.totalorder %s34, %s50
      %p52 = scmp.eq.s32.totalorder %s26, 0
      %p53 = por %p51, %p52
      %s55 = sadd.s32 %s54, 1
      %p58 = scmp.eq.s32.totalorder %s20, 1
      %p59 = scmp.ne.s32.totalorder %s54, %s56
      %p60 = scmp.eq.s32.totalorder %s20, 0
      %p61 = por %p59, %p60
      %p62 = scmp.ne.s32.totalorder %s54, %s56
      %p63 = scmp.eq.s32.totalorder %s25, 1
      %p64 = por %p62, %p63
      %p65 = scmp.ne.s32.totalorder %s56, %s57
      %p66 = scmp.eq.s32.totalorder %s25, 0
      %p67 = por %p65, %p66
      %p68 = scmp.ne.s32.totalorder %s56, %s57
      %p69 = scmp.eq.s32.totalorder %s26, 1
      %p70 = por %p68, %p69
      %p72 = scmp.ne.s32.totalorder %s57, %s71
      %p73 = scmp.eq.s32.totalorder %s26, 0
      %p74 = por %p72, %p73
      %s76 = sadd.s32 %s75, 1
      %p79 = scmp.eq.s32.totalorder %s20, 1
      %p80 = scmp.ne.s32.totalorder %s75, %s77
      %p81 = scmp.eq.s32.totalorder %s20, 0
      %p82 = por %p80, %p81
      %p83 = scmp.ne.s32.totalorder %s75, %s77
      %p84 = scmp.eq.s32.totalorder %s25, 1
      %p85 = por %p83, %p84
      %p86 = scmp.ne.s32.totalorder %s77, %s78
      %p87 = scmp.eq.s32.totalorder %s25, 0
      %p88 = por %p86, %p87
      %p89 = scmp.ne.s32.totalorder %s77, %s78
      %p90 = scmp.eq.s32.totalorder %s26, 1
      %p91 = por %p89, %p90
      %p93 = scmp.ne.s32.totalorder %s78, %s92
      %p94 = scmp.eq.s32.totalorder %s26, 0
      %p95 = por %p93, %p94
      %s97 = sadd.s32 %s96, 1
      %p100 = scmp.eq.s32.totalorder %s20, 1
      %p101 = scmp.ne.s32.totalorder %s96, %s98
      %p102 = scmp.eq.s32.totalorder %s20, 0
      %p103 = por %p101, %p102
      %p104 = scmp.ne.s32.totalorder %s96, %s98
      %p105 = scmp.eq.s32.totalorder %s25, 1
      %p106 = por %p104, %p105
      %p107 = scmp.ne.s32.totalorder %s98, %s99
      %p108 = scmp.eq.s32.totalorder %s25, 0
      %p109 = por %p107, %p108
      %p110 = scmp.ne.s32.totalorder %s98, %s99
      %p111 = scmp.eq.s32.totalorder %s26, 1
      %p112 = por %p110, %p111
      %p114 = scmp.ne.s32.totalorder %s99, %s113
      %p115 = scmp.eq.s32.totalorder %s26, 0
      %p116 = por %p114, %p115
      %s118 = sadd.s32 %s117, 1
      %p121 = scmp.eq.s32.totalorder %s20, 1
      %p122 = scmp.ne.s32.totalorder %s117, %s119
      %p123 = scmp.eq.s32.totalorder %s20, 0
      %p124 = por %p122, %p123
      %p125 = scmp.ne.s32.totalorder %s117, %s119
      %p126 = scmp.eq.s32.totalorder %s25, 1
      %p127 = por %p125, %p126
      %p128 = scmp.ne.s32.totalorder %s119, %s120
      %p129 = scmp.eq.s32.totalorder %s25, 0
      %p130 = por %p128, %p129
      %p131 = scmp.ne.s32.totalorder %s119, %s120
      %p132 = scmp.eq.s32.totalorder %s26, 1
      %p133 = por %p131, %p132
      %p135 = scmp.ne.s32.totalorder %s120, %s134
      %p136 = scmp.eq.s32.totalorder %s26, 0
      %p137 = por %p135, %p136
      %s139 = sadd.s32 %s138, 1
      %p142 = scmp.eq.s32.totalorder %s20, 1
      %p143 = scmp.ne.s32.totalorder %s138, %s140
      %p144 = scmp.eq.s32.totalorder %s20, 0
      %p145 = por %p143, %p144
      %p146 = scmp.ne.s32.totalorder %s138, %s140
      %p147 = scmp.eq.s32.totalorder %s25, 1
      %p148 = por %p146, %p147
      %p149 = scmp.ne.s32.totalorder %s140, %s141
      %p150 = scmp.eq.s32.totalorder %s25, 0
      %p151 = por %p149, %p150
      %p152 = scmp.ne.s32.totalorder %s140, %s141
      %p153 = scmp.eq.s32.totalorder %s26, 1
      %p154 = por %p152, %p153
      %p156 = scmp.ne.s32.totalorder %s141, %s155
      %p157 = scmp.eq.s32.totalorder %s26, 0
      %p158 = por %p156, %p157
      %s160 = sadd.s32 %s159, 1
      %p163 = scmp.eq.s32.totalorder %s20, 1
      %p164 = scmp.ne.s32.totalorder %s159, %s161
      %p165 = scmp.eq.s32.totalorder %s20, 0
      %p166 = por %p164, %p165
      %p167 = scmp.ne.s32.totalorder %s159, %s161
      %p168 = scmp.eq.s32.totalorder %s25, 1
      %p169 = por %p167, %p168
      %p170 = scmp.ne.s32.totalorder %s161, %s162
      %p171 = scmp.eq.s32.totalorder %s25, 0
      %p172 = por %p170, %p171
      %p173 = scmp.ne.s32.totalorder %s161, %s162
      %p174 = scmp.eq.s32.totalorder %s26, 1
      %p175 = por %p173, %p174
      %p177 = scmp.ne.s32.totalorder %s162, %s176
      %p178 = scmp.eq.s32.totalorder %s26, 0
      %p179 = por %p177, %p178
      %s180 = ssub.s32 %s20, %s27
      %p181 = scmp.eq.s32.totalorder %s180, 0
      %s183 = sadd.s32 %s182, 1
      %s184 = scalar_select %p181, %s182, %s183
      %p187 = pneg %p181
      %p188 = scmp.eq.s32.totalorder %s20, 1
      %p189 = por %p187, %p188
      %p190 = scmp.ne.s32.totalorder %s182, %s185
      %p191 = scmp.eq.s32.totalorder %s20, 0
      %p192 = por %p190, %p191
      %p193 = scmp.ne.s32.totalorder %s182, %s185
      %p194 = scmp.eq.s32.totalorder %s25, 1
      %p195 = por %p193, %p194
      %p196 = scmp.ne.s32.totalorder %s185, %s186
      %p197 = scmp.eq.s32.totalorder %s25, 0
      %p198 = por %p196, %p197
      %p199 = scmp.ne.s32.totalorder %s185, %s186
      %p200 = scmp.eq.s32.totalorder %s26, 1
      %p201 = por %p199, %p200
      %p203 = scmp.ne.s32.totalorder %s186, %s202
      %p204 = scmp.eq.s32.totalorder %s26, 0
      %p205 = por %p203, %p204
      %p206 = scmp.le.s32.totalorder 1, %s20
      %p207 = scmp.lt.s32.totalorder %s20, 3
      %p208 = pnand %p206, %p207
      %p209 = pneg %p208
      // Predicated region
      $region9: #{tpu_custom_call.1} parent=5 // pred_check
        _
      $region10: #{tpu_custom_call.1} parent=5 // pred_check_branch
        %211 = sbr.rel (%p208) target = $region12
      $region11: #{tpu_custom_call.1} parent=5 // pred_region
        %s212 = ssub.s32 %s20, 1
        // Predicated region
        $region13: #{tpu_custom_call.1} parent=11 // pred_check
          %p213 = pneg %p67
        $region14: #{tpu_custom_call.1} parent=11 // pred_check_branch
          %215 = sbr.rel (%p213) target = $region16
        $region15: #{tpu_custom_call.1} parent=11 // pred_region
          %s217 = ssub.s32 1024, 1024
          %218 = vsyncadd [#allocation6], %s217
          %s219 = sshll.u32 [#allocation5], 4
          %s220 = int_to_ptr.vmem [resolvable:$true] %s219
          %225 = dma.hbm_to_vmem [thread:$0]  %s1, 1024, %s220, [#allocation6], 128, 128, 8
        $region16: #{tpu_custom_call.1} parent=11 // pred_fallthru
          _
        // Predicated region
        $region17: #{tpu_custom_call.1} parent=11 // pred_check
          %p226 = pneg %p88
        $region18: #{tpu_custom_call.1} parent=11 // pred_check_branch
          %228 = sbr.rel (%p226) target = $region20
        $region19: #{tpu_custom_call.1} parent=11 // pred_region
          _
        $region20: #{tpu_custom_call.1} parent=11 // pred_fallthru
          _
        // Predicated region
        $region21: #{tpu_custom_call.1} parent=11 // pred_check
          %p229 = pneg %p109
        $region22: #{tpu_custom_call.1} parent=11 // pred_check_branch
          %231 = sbr.rel (%p229) target = $region24
        $region23: #{tpu_custom_call.1} parent=11 // pred_region
          _
        $region24: #{tpu_custom_call.1} parent=11 // pred_fallthru
          _
        // Predicated region
        $region25: #{tpu_custom_call.1} parent=11 // pred_check
          %p232 = pneg %p130
        $region26: #{tpu_custom_call.1} parent=11 // pred_check_branch
          %234 = sbr.rel (%p232) target = $region28
        $region27: #{tpu_custom_call.1} parent=11 // pred_region
          _
        $region28: #{tpu_custom_call.1} parent=11 // pred_fallthru
          _
        // Predicated region
        $region29: #{tpu_custom_call.1} parent=11 // pred_check
          %p235 = pneg %p151
        $region30: #{tpu_custom_call.1} parent=11 // pred_check_branch
          %237 = sbr.rel (%p235) target = $region32
        $region31: #{tpu_custom_call.1} parent=11 // pred_region
          _
        $region32: #{tpu_custom_call.1} parent=11 // pred_fallthru
          _
        // Predicated region
        $region33: #{tpu_custom_call.1} parent=11 // pred_check
          %p238 = pneg %p172
        $region34: #{tpu_custom_call.1} parent=11 // pred_check_branch
          %240 = sbr.rel (%p238) target = $region36
        $region35: #{tpu_custom_call.1} parent=11 // pred_region
          _
        $region36: #{tpu_custom_call.1} parent=11 // pred_fallthru
          _
      $region12: #{tpu_custom_call.1} parent=5 // pred_fallthru
        _
      %p241 = scmp.lt.s32.totalorder %s20, 2
      // Predicated region
      $region37: #{tpu_custom_call.1} parent=5 // pred_check
        %p242 = pneg %p241
      $region38: #{tpu_custom_call.1} parent=5 // pred_check_branch
        %244 = sbr.rel (%p242) target = $region40
      $region39: #{tpu_custom_call.1} parent=5 // pred_region
        // Predicated region
        $region41: #{tpu_custom_call.1} parent=39 // pred_check
          %p245 = pneg %p40
        $region42: #{tpu_custom_call.1} parent=39 // pred_check_branch
          %247 = sbr.rel (%p245) target = $region44
        $region43: #{tpu_custom_call.1} parent=39 // pred_region
          %s248 = sand.u32 %s30, 1
          %s249 = scalar_lea.sflag [#allocation3], %s248
          %s250 = sand.u32 %s30, 1
          %s251 = smul.addr %s250, 32
          %s252 = scalar_lea.vmem [#allocation2], %s251
          %s254 = ssub.s32 512, 512
          %255 = vsyncadd %s249, %s254
          %s256 = smul.addr %s20, 8
          %s257 = smul.addr %s256, 64
          %s258 = scalar_lea.hbm %s0, %s257
          %s259 = sshll.u32 %s252, 4
          %s260 = int_to_ptr.vmem [resolvable:$true] %s259
          %265 = dma.hbm_to_vmem [thread:$0]  %s258, 512, %s260, %s249, 64, 64, 4
        $region44: #{tpu_custom_call.1} parent=39 // pred_fallthru
          _
      $region40: #{tpu_custom_call.1} parent=5 // pred_fallthru
        _
      %p266 = scmp.le.s32.totalorder 1, %s20
      %p267 = scmp.lt.s32.totalorder %s20, 3
      %p268 = pnand %p266, %p267
      %p269 = pneg %p268
      // Predicated region
      $region45: #{tpu_custom_call.1} parent=5 // pred_check
        _
      $region46: #{tpu_custom_call.1} parent=5 // pred_check_branch
        %271 = sbr.rel (%p268) target = $region48
      $region47: #{tpu_custom_call.1} parent=5 // pred_region
        %s272 = ssub.s32 %s20, 1
        %s273 = sand.u32 %s33, 1
        %s274 = scalar_lea.sflag [#allocation3], %s273
        %s275 = sand.u32 %s33, 1
        %s276 = smul.addr %s275, 32
        %s277 = scalar_lea.vmem [#allocation2], %s276
        // Predicated region
        $region49: #{tpu_custom_call.1} parent=47 // pred_check
          %p278 = pneg %p46
        $region50: #{tpu_custom_call.1} parent=47 // pred_check_branch
          %280 = sbr.rel (%p278) target = $region52
        $region51: #{tpu_custom_call.1} parent=47 // pred_region
          %281 = dma.done %s274, 512
        $region52: #{tpu_custom_call.1} parent=47 // pred_fallthru
          _
        // Predicated region
        $region53: #{tpu_custom_call.1} parent=47 // pred_check
          %p282 = pneg %p67
        $region54: #{tpu_custom_call.1} parent=47 // pred_check_branch
          %284 = sbr.rel (%p282) target = $region56
        $region55: #{tpu_custom_call.1} parent=47 // pred_region
          %285 = dma.done [#allocation6], 1024
        $region56: #{tpu_custom_call.1} parent=47 // pred_fallthru
          _
        %s286 = sand.u32 %s33, 1
        %s287 = scalar_lea.sflag [#allocation3], %s286
        %s288 = sand.u32 %s33, 1
        %s289 = smul.addr %s288, 32
        %s290 = scalar_lea.vmem [#allocation2], %s289
        %p291 = pneg %p46
        %p292 = pneg %p43
        %p293 = pneg %p67
        %p294 = pneg %p64
        %p295 = pneg %p88
        %p296 = pneg %p85
        %p297 = pneg %p109
        %p298 = pneg %p106
        %p299 = pneg %p130
        %p300 = pneg %p127
        %p301 = pneg %p151
        %p302 = pneg %p148
        %p303 = pneg %p172
        %p304 = pneg %p169
        %p305 = pneg %p198
        %p306 = pneg %p195
        %s307 = sand.u32 %s185, 1
        %s308 = scalar_lea.sflag [#allocation4], %s307
        %s309 = sand.u32 %s185, 1
        %s310 = smul.addr %s309, 64
        %s311 = scalar_lea.vmem [#allocation7], %s310
        %v313 = vld [vmem:[%s277] sm:$0xf]
        %v314 = vld [vmem:[%s277 + $0x4] sm:$0xf]
        %v315 = vld [vmem:[%s277 + $0x8] sm:$0xf]
        %v316 = vld [vmem:[%s277 + $0xc] sm:$0xf]
        %v317 = vld [vmem:[%s277 + $0x10] sm:$0xf]
        %v318 = vld [vmem:[%s277 + $0x14] sm:$0xf]
        %v319 = vld [vmem:[%s277 + $0x18] sm:$0xf]
        %v320 = vld [vmem:[%s277 + $0x1c] sm:$0xf]
        %v321 = vld [vmem:[%s2] sm:$0xf]
        %v322 = vld [vmem:[%s2 + $0x4] sm:$0xf]
        %v323 = vld [vmem:[%s2 + $0x8] sm:$0xf]
        %v324 = vld [vmem:[%s2 + $0xc] sm:$0xf]
        %v325 = vld [vmem:[%s2 + $0x10] sm:$0xf]
        %v326 = vld [vmem:[%s2 + $0x14] sm:$0xf]
        %v327 = vld [vmem:[%s2 + $0x18] sm:$0xf]
        %v328 = vld [vmem:[%s2 + $0x1c] sm:$0xf]
        %v337 = vunpack.c.l.b16 %v313
        %v338 = vunpack.c.l.b16 %v314
        %v339 = vunpack.c.l.b16 %v315
        %v340 = vunpack.c.l.b16 %v316
        %v341 = vunpack.c.l.b16 %v317
        %v342 = vunpack.c.l.b16 %v318
        %v343 = vunpack.c.l.b16 %v319
        %v344 = vunpack.c.l.b16 %v320
        %v345 = vpack.c.b16 %v338, %v337
        %v346 = vpack.c.b16 %v340, %v339
        %v347 = vpack.c.b16 %v342, %v341
        %v348 = vpack.c.b16 %v344, %v343
        %v357 = vunpack.c.l.b16 %v321
        %v358 = vunpack.c.l.b16 %v322
        %v359 = vunpack.c.l.b16 %v323
        %v360 = vunpack.c.l.b16 %v324
        %v361 = vunpack.c.l.b16 %v325
        %v362 = vunpack.c.l.b16 %v326
        %v363 = vunpack.c.l.b16 %v327
        %v364 = vunpack.c.l.b16 %v328
        %v365 = vpack.c.b16 %v358, %v357
        %v366 = vpack.c.b16 %v360, %v359
        %v367 = vpack.c.b16 %v362, %v361
        %v368 = vpack.c.b16 %v364, %v363
        %vm373 = vcmask 523264
        %v375 = vsel %vm373, %v345, 0
        %v378 = vsel %vm373, %v346, 0
        %v381 = vsel %vm373, %v347, 0
        %v384 = vsel %vm373, %v348, 0
        %386 = vmatprep.subr.bf16.mxu0 0
        %387 = vmatpush1.bf16.msra.mxu0 0
        %388 = vmatprep.subr.bf16.mxu0 0
        %389 = vmatpush1.bf16.msra.mxu0 0
        %390 = vmatprep.subr.bf16.mxu0 0
        %391 = vmatpush1.bf16.msra.mxu0 0
        %392 = vmatprep.subr.bf16.mxu0 0
        %393 = vmatpush1.bf16.msra.mxu0 0
        %394 = vmatprep.subr.bf16.mxu0 0
        %395 = vmatpush1.bf16.msra.mxu0 %v368
        %396 = vmatprep.subr.bf16.mxu0 0
        %397 = vmatpush1.bf16.msra.mxu0 %v367
        %398 = vmatprep.subr.bf16.mxu0 0
        %399 = vmatpush1.bf16.msra.mxu0 %v366
        %400 = vmatprep.subr.bf16.mxu0 0
        %401 = vmatpush1.bf16.msra.mxu0 %v365
        %402 = vmatprep.subr.bf16.mxu0 0
        %403 = vmatpush2.bf16.msra.mxu0 0
        %404 = vmatprep.subr.bf16.mxu0 0
        %405 = vmatpush2.bf16.msra.mxu0 0
        %406 = vmatprep.subr.bf16.mxu0 0
        %407 = vmatpush2.bf16.msra.mxu0 0
        %408 = vmatprep.subr.bf16.mxu0 0
        %409 = vmatpush2.bf16.msra.mxu0 0
        %410 = vmatprep.subr.bf16.mxu0 0
        %411 = vmatpush2.bf16.msra.mxu0 0
        %412 = vmatprep.subr.bf16.mxu0 0
        %413 = vmatpush2.bf16.msra.mxu0 0
        %414 = vmatprep.subr.bf16.mxu0 0
        %415 = vmatpush2.bf16.msra.mxu0 0
        %416 = vmatprep.subr.bf16.mxu0 0
        %417 = vmatpush2.bf16.msra.mxu0 0
        %418 = vmatprep.mubr.bf16.mxu0 0
        %419 = vmatmul.mubr.bf16.gmra.mxu0 %v375
        %v420 = vpop.f32.mrf.mxu0
        %v421 = vadd.f32 0.0, %v420
        %v422 = vpop.f32.mrf.mxu0
        %v423 = vpop.f32.mrf.mxu0
        %v424 = vadd.f32 0.0, %v423
        %v425 = vpop.f32.mrf.mxu0
        %426 = vmatprep.mubr.bf16.mxu0 0
        %427 = vmatmul.mubr.bf16.gmra.mxu0 %v378
        %v428 = vpop.f32.mrf.mxu0
        %v429 = vadd.f32 0.0, %v428
        %v430 = vpop.f32.mrf.mxu0
        %v431 = vpop.f32.mrf.mxu0
        %v432 = vadd.f32 0.0, %v431
        %v433 = vpop.f32.mrf.mxu0
        %434 = vmatprep.mubr.bf16.mxu0 0
        %435 = vmatmul.mubr.bf16.gmra.mxu0 %v381
        %v436 = vpop.f32.mrf.mxu0
        %v437 = vadd.f32 0.0, %v436
        %v438 = vpop.f32.mrf.mxu0
        %v439 = vpop.f32.mrf.mxu0
        %v440 = vadd.f32 0.0, %v439
        %v441 = vpop.f32.mrf.mxu0
        %442 = vmatprep.mubr.bf16.mxu0 0
        %443 = vmatmul.mubr.bf16.gmra.mxu0 %v384
        %v444 = vpop.f32.mrf.mxu0
        %v445 = vadd.f32 0.0, %v444
        %v446 = vpop.f32.mrf.mxu0
        %v447 = vpop.f32.mrf.mxu0
        %v448 = vadd.f32 0.0, %v447
        %v449 = vpop.f32.mrf.mxu0
        %450 = vdwg.mxu0
        %v451 = vld [vmem:[%s3] sm:$0x1]
        %v453 = vlaneseq
        %v454 = vshrl.u32 %v453, 7
        %v455 = vsub.s32 0, %v454
        %v456 = vrot.slane %v451, %v455
        %v458 = vadd.f32 %v421, %v456
        %v459 = vadd.f32 %v424, %v456
        %v460 = vadd.f32 %v429, %v456
        %v461 = vadd.f32 %v432, %v456
        %v462 = vadd.f32 %v437, %v456
        %v463 = vadd.f32 %v440, %v456
        %v464 = vadd.f32 %v445, %v456
        %v465 = vadd.f32 %v448, %v456
        %v466 = vpack.c.bf16 %v459, %v458
        %v467 = vpack.c.bf16 %v461, %v460
        %v468 = vpack.c.bf16 %v463, %v462
        %v469 = vpack.c.bf16 %v465, %v464
        %v470 = vpack.c.bf16 %v424, %v421
        %v471 = vpack.c.bf16 %v432, %v429
        %v472 = vpack.c.bf16 %v440, %v437
        %v473 = vpack.c.bf16 %v448, %v445
        %478 = vrot.lane.b32.xlu0 %v470, 96
        %v479 = vpop.permute.xlu0 %478
        %480 = vrot.lane.b32.xlu0 %v471, 96
        %v481 = vpop.permute.xlu0 %480
        %482 = vrot.lane.b32.xlu0 %v472, 96
        %v483 = vpop.permute.xlu0 %482
        %484 = vrot.lane.b32.xlu0 %v473, 96
        %v485 = vpop.permute.xlu0 %484
        %vm486 = vcmask 130048
        %v488 = vsel %vm486, %v466, 0
        %v491 = vsel %vm486, %v467, 0
        %v494 = vsel %vm486, %v468, 0
        %v497 = vsel %vm486, %v469, 0
        %v500 = vsel %vm486, %v479, 0
        %v503 = vsel %vm486, %v481, 0
        %v506 = vsel %vm486, %v483, 0
        %v509 = vsel %vm486, %v485, 0
        %511 = vmatprep.subr.bf16.mxu0 0
        %512 = vmatpush1.bf16.xpose.msra.mxu0 0
        %513 = vmatprep.subr.bf16.mxu0 0
        %514 = vmatpush1.bf16.xpose.msra.mxu0 0
        %515 = vmatprep.subr.bf16.mxu0 0
        %516 = vmatpush1.bf16.xpose.msra.mxu0 0
        %517 = vmatprep.subr.bf16.mxu0 0
        %518 = vmatpush1.bf16.xpose.msra.mxu0 0
        %519 = vmatprep.subr.bf16.mxu0 0
        %520 = vmatpush1.bf16.xpose.msra.mxu0 %v509
        %521 = vmatprep.subr.bf16.mxu0 0
        %522 = vmatpush1.bf16.xpose.msra.mxu0 %v506
        %523 = vmatprep.subr.bf16.mxu0 0
        %524 = vmatpush1.bf16.xpose.msra.mxu0 %v503
        %525 = vmatprep.subr.bf16.mxu0 0
        %526 = vmatpush1.bf16.xpose.msra.mxu0 %v500
        %527 = vmatprep.subr.bf16.mxu0 0
        %528 = vmatpush2.bf16.xpose.msra.mxu0 0
        %529 = vmatprep.subr.bf16.mxu0 0
        %530 = vmatpush2.bf16.xpose.msra.mxu0 0
        %531 = vmatprep.subr.bf16.mxu0 0
        %532 = vmatpush2.bf16.xpose.msra.mxu0 0
        %533 = vmatprep.subr.bf16.mxu0 0
        %534 = vmatpush2.bf16.xpose.msra.mxu0 0
        %535 = vmatprep.subr.bf16.mxu0 0
        %536 = vmatpush2.bf16.xpose.msra.mxu0 0
        %537 = vmatprep.subr.bf16.mxu0 0
        %538 = vmatpush2.bf16.xpose.msra.mxu0 0
        %539 = vmatprep.subr.bf16.mxu0 0
        %540 = vmatpush2.bf16.xpose.msra.mxu0 0
        %541 = vmatprep.subr.bf16.mxu0 0
        %542 = vmatpush2.bf16.xpose.msra.mxu0 0
        %543 = vmatprep.mubr.bf16.mxu0 0
        %544 = vmatmul.mubr.bf16.gmra.mxu0 %v488
        %v545 = vpop.f32.mrf.mxu0
        %v546 = vadd.f32 0.0, %v545
        %v547 = vpop.f32.mrf.mxu0
        %v548 = vpop.f32.mrf.mxu0
        %v549 = vadd.f32 0.0, %v548
        %v550 = vpop.f32.mrf.mxu0
        %551 = vmatprep.mubr.bf16.mxu0 0
        %552 = vmatmul.mubr.bf16.gmra.mxu0 %v491
        %v553 = vpop.f32.mrf.mxu0
        %v554 = vadd.f32 0.0, %v553
        %v555 = vpop.f32.mrf.mxu0
        %v556 = vpop.f32.mrf.mxu0
        %v557 = vadd.f32 0.0, %v556
        %v558 = vpop.f32.mrf.mxu0
        %559 = vmatprep.mubr.bf16.mxu0 0
        %560 = vmatmul.mubr.bf16.gmra.mxu0 %v494
        %v561 = vpop.f32.mrf.mxu0
        %v562 = vadd.f32 0.0, %v561
        %v563 = vpop.f32.mrf.mxu0
        %v564 = vpop.f32.mrf.mxu0
        %v565 = vadd.f32 0.0, %v564
        %v566 = vpop.f32.mrf.mxu0
        %567 = vmatprep.mubr.bf16.mxu0 0
        %568 = vmatmul.mubr.bf16.gmra.mxu0 %v497
        %v569 = vpop.f32.mrf.mxu0
        %v570 = vadd.f32 0.0, %v569
        %v571 = vpop.f32.mrf.mxu0
        %v572 = vpop.f32.mrf.mxu0
        %v573 = vadd.f32 0.0, %v572
        %v574 = vpop.f32.mrf.mxu0
        %575 = vdwg.mxu0
        %v576 = vld [vmem:[#allocation5] sm:$0xff]
        %v577 = vld [vmem:[#allocation5 + $0x8] sm:$0xff]
        %v578 = vld [vmem:[#allocation5 + $0x10] sm:$0xff]
        %v579 = vld [vmem:[#allocation5 + $0x18] sm:$0xff]
        %v580 = vld [vmem:[#allocation5 + $0x20] sm:$0xff]
        %v581 = vld [vmem:[#allocation5 + $0x28] sm:$0xff]
        %v582 = vld [vmem:[#allocation5 + $0x30] sm:$0xff]
        %v583 = vld [vmem:[#allocation5 + $0x38] sm:$0xff]
        %v584 = vmul.f32 %v546, %v576
        %v585 = vmul.f32 %v549, %v577
        %v586 = vmul.f32 %v554, %v578
        %v587 = vmul.f32 %v557, %v579
        %v588 = vmul.f32 %v562, %v580
        %v589 = vmul.f32 %v565, %v581
        %v590 = vmul.f32 %v570, %v582
        %v591 = vmul.f32 %v573, %v583
        %v592 = vpack.c.bf16 %v585, %v584
        %v593 = vpack.c.bf16 %v587, %v586
        %v594 = vpack.c.bf16 %v589, %v588
        %v595 = vpack.c.bf16 %v591, %v590
        %596 = vrot.lane.b32.xlu0 %v470, 112
        %v597 = vpop.permute.xlu0 %596
        %598 = vrot.lane.b32.xlu0 %v471, 112
        %v599 = vpop.permute.xlu0 %598
        %600 = vrot.lane.b32.xlu0 %v472, 112
        %v601 = vpop.permute.xlu0 %600
        %602 = vrot.lane.b32.xlu0 %v473, 112
        %v603 = vpop.permute.xlu0 %602
        %v609 = vsel %vm373, %v592, 0
        %v612 = vsel %vm373, %v593, 0
        %v615 = vsel %vm373, %v594, 0
        %v618 = vsel %vm373, %v595, 0
        %620 = vmatprep.subr.bf16.mxu0 0
        %621 = vmatpush1.bf16.msra.mxu0 0
        %622 = vmatprep.subr.bf16.mxu0 0
        %623 = vmatpush1.bf16.msra.mxu0 0
        %624 = vmatprep.subr.bf16.mxu0 0
        %625 = vmatpush1.bf16.msra.mxu0 0
        %626 = vmatprep.subr.bf16.mxu0 0
        %627 = vmatpush1.bf16.msra.mxu0 0
        %628 = vmatprep.subr.bf16.mxu0 0
        %629 = vmatpush1.bf16.msra.mxu0 %v603
        %630 = vmatprep.subr.bf16.mxu0 0
        %631 = vmatpush1.bf16.msra.mxu0 %v601
        %632 = vmatprep.subr.bf16.mxu0 0
        %633 = vmatpush1.bf16.msra.mxu0 %v599
        %634 = vmatprep.subr.bf16.mxu0 0
        %635 = vmatpush1.bf16.msra.mxu0 %v597
        %636 = vmatprep.subr.bf16.mxu0 0
        %637 = vmatpush2.bf16.msra.mxu0 0
        %638 = vmatprep.subr.bf16.mxu0 0
        %639 = vmatpush2.bf16.msra.mxu0 0
        %640 = vmatprep.subr.bf16.mxu0 0
        %641 = vmatpush2.bf16.msra.mxu0 0
        %642 = vmatprep.subr.bf16.mxu0 0
        %643 = vmatpush2.bf16.msra.mxu0 0
        %644 = vmatprep.subr.bf16.mxu0 0
        %645 = vmatpush2.bf16.msra.mxu0 0
        %646 = vmatprep.subr.bf16.mxu0 0
        %647 = vmatpush2.bf16.msra.mxu0 0
        %648 = vmatprep.subr.bf16.mxu0 0
        %649 = vmatpush2.bf16.msra.mxu0 0
        %650 = vmatprep.subr.bf16.mxu0 0
        %651 = vmatpush2.bf16.msra.mxu0 0
        %652 = vmatprep.mubr.bf16.mxu0 0
        %653 = vmatmul.mubr.bf16.gmra.mxu0 %v609
        %v654 = vpop.f32.mrf.mxu0
        %v655 = vadd.f32 0.0, %v654
        %v656 = vpop.f32.mrf.mxu0
        %v657 = vpop.f32.mrf.mxu0
        %v658 = vadd.f32 0.0, %v657
        %v659 = vpop.f32.mrf.mxu0
        %660 = vmatprep.mubr.bf16.mxu0 0
        %661 = vmatmul.mubr.bf16.gmra.mxu0 %v612
        %v662 = vpop.f32.mrf.mxu0
        %v663 = vadd.f32 0.0, %v662
        %v664 = vpop.f32.mrf.mxu0
        %v665 = vpop.f32.mrf.mxu0
        %v666 = vadd.f32 0.0, %v665
        %v667 = vpop.f32.mrf.mxu0
        %668 = vmatprep.mubr.bf16.mxu0 0
        %669 = vmatmul.mubr.bf16.gmra.mxu0 %v615
        %v670 = vpop.f32.mrf.mxu0
        %v671 = vadd.f32 0.0, %v670
        %v672 = vpop.f32.mrf.mxu0
        %v673 = vpop.f32.mrf.mxu0
        %v674 = vadd.f32 0.0, %v673
        %v675 = vpop.f32.mrf.mxu0
        %676 = vmatprep.mubr.bf16.mxu0 0
        %677 = vmatmul.mubr.bf16.gmra.mxu0 %v618
        %v678 = vpop.f32.mrf.mxu0
        %v679 = vadd.f32 0.0, %v678
        %v680 = vpop.f32.mrf.mxu0
        %v681 = vpop.f32.mrf.mxu0
        %v682 = vadd.f32 0.0, %v681
        %v683 = vpop.f32.mrf.mxu0
        %684 = vdwg.mxu0
        %v685 = vpack.c.bf16 %v658, %v655
        %v686 = vpack.c.bf16 %v666, %v663
        %v687 = vpack.c.bf16 %v674, %v671
        %v688 = vpack.c.bf16 %v682, %v679
        %v689 = vld [vmem:[%s4] sm:$0xf]
        %v690 = vld [vmem:[%s4 + $0x4] sm:$0xf]
        %v691 = vld [vmem:[%s5] sm:$0x1]
        %v693 = vlaneseq
        %v694 = vshrl.u32 %v693, 7
        %v695 = vsub.s32 0, %v694
        %v696 = vrot.slane %v691, %v695
        %v700 = vunpack.c.l.b16 %v689
        %v701 = vunpack.c.l.b16 %v690
        %v702 = vpack.c.b16 %v701, %v700
        %v705 = vsel %vm486, %v685, 0
        %v708 = vsel %vm486, %v686, 0
        %v711 = vsel %vm486, %v687, 0
        %v714 = vsel %vm486, %v688, 0
        %716 = vmatprep.subr.bf16.mxu0 0
        %717 = vmatpush1.bf16.msra.mxu0 0
        %718 = vmatprep.subr.bf16.mxu0 0
        %719 = vmatpush1.bf16.msra.mxu0 0
        %720 = vmatprep.subr.bf16.mxu0 0
        %721 = vmatpush1.bf16.msra.mxu0 0
        %722 = vmatprep.subr.bf16.mxu0 0
        %723 = vmatpush1.bf16.msra.mxu0 0
        %724 = vmatprep.subr.bf16.mxu0 0
        %725 = vmatpush1.bf16.msra.mxu0 0
        %726 = vmatprep.subr.bf16.mxu0 0
        %727 = vmatpush1.bf16.msra.mxu0 0
        %728 = vmatprep.subr.bf16.mxu0 0
        %729 = vmatpush1.bf16.msra.mxu0 0
        %730 = vmatprep.subr.bf16.mxu0 0
        %731 = vmatpush1.bf16.msra.mxu0 %v702
        %732 = vmatprep.subr.bf16.mxu0 0
        %733 = vmatpush2.bf16.msra.mxu0 0
        %734 = vmatprep.subr.bf16.mxu0 0
        %735 = vmatpush2.bf16.msra.mxu0 0
        %736 = vmatprep.subr.bf16.mxu0 0
        %737 = vmatpush2.bf16.msra.mxu0 0
        %738 = vmatprep.subr.bf16.mxu0 0
        %739 = vmatpush2.bf16.msra.mxu0 0
        %740 = vmatprep.subr.bf16.mxu0 0
        %741 = vmatpush2.bf16.msra.mxu0 0
        %742 = vmatprep.subr.bf16.mxu0 0
        %743 = vmatpush2.bf16.msra.mxu0 0
        %744 = vmatprep.subr.bf16.mxu0 0
        %745 = vmatpush2.bf16.msra.mxu0 0
        %746 = vmatprep.subr.bf16.mxu0 0
        %747 = vmatpush2.bf16.msra.mxu0 0
        %748 = vmatprep.mubr.bf16.mxu0 0
        %749 = vmatmul.mubr.bf16.gmra.mxu0 %v705
        %v750 = vpop.f32.mrf.mxu0
        %v751 = vadd.f32 %v696, %v750
        %v752 = vpop.f32.mrf.mxu0
        %v753 = vpop.f32.mrf.mxu0
        %v754 = vadd.f32 %v696, %v753
        %v755 = vpop.f32.mrf.mxu0
        %756 = vmatprep.mubr.bf16.mxu0 0
        %757 = vmatmul.mubr.bf16.gmra.mxu0 %v708
        %v758 = vpop.f32.mrf.mxu0
        %v759 = vadd.f32 %v696, %v758
        %v760 = vpop.f32.mrf.mxu0
        %v761 = vpop.f32.mrf.mxu0
        %v762 = vadd.f32 %v696, %v761
        %v763 = vpop.f32.mrf.mxu0
        %764 = vmatprep.mubr.bf16.mxu0 0
        %765 = vmatmul.mubr.bf16.gmra.mxu0 %v711
        %v766 = vpop.f32.mrf.mxu0
        %v767 = vadd.f32 %v696, %v766
        %v768 = vpop.f32.mrf.mxu0
        %v769 = vpop.f32.mrf.mxu0
        %v770 = vadd.f32 %v696, %v769
        %v771 = vpop.f32.mrf.mxu0
        %772 = vmatprep.mubr.bf16.mxu0 0
        %773 = vmatmul.mubr.bf16.gmra.mxu0 %v714
        %v774 = vpop.f32.mrf.mxu0
        %v775 = vadd.f32 %v696, %v774
        %v776 = vpop.f32.mrf.mxu0
        %v777 = vpop.f32.mrf.mxu0
        %v778 = vadd.f32 %v696, %v777
        %v779 = vpop.f32.mrf.mxu0
        %780 = vdwg.mxu0
        %v781 = vmul.f32 %v751, %v751
        %v782 = vmul.f32 %v754, %v754
        %v783 = vmul.f32 %v759, %v759
        %v784 = vmul.f32 %v762, %v762
        %v785 = vmul.f32 %v767, %v767
        %v786 = vmul.f32 %v770, %v770
        %v787 = vmul.f32 %v775, %v775
        %v788 = vmul.f32 %v778, %v778
        %v789 = vsel %vm373, %v781, 0.0
        %790 = vadd.xlane.f32.xlu0 %v789
        %v791 = vpop.xlane.xlu0 %790
        %v792 = vsel %vm373, %v782, 0.0
        %793 = vadd.xlane.f32.xlu0 %v792
        %v794 = vpop.xlane.xlu0 %793
        %v795 = vsel %vm373, %v783, 0.0
        %796 = vadd.xlane.f32.xlu0 %v795
        %v797 = vpop.xlane.xlu0 %796
        %v798 = vsel %vm373, %v784, 0.0
        %799 = vadd.xlane.f32.xlu0 %v798
        %v800 = vpop.xlane.xlu0 %799
        %v801 = vsel %vm373, %v785, 0.0
        %802 = vadd.xlane.f32.xlu0 %v801
        %v803 = vpop.xlane.xlu0 %802
        %v804 = vsel %vm373, %v786, 0.0
        %805 = vadd.xlane.f32.xlu0 %v804
        %v806 = vpop.xlane.xlu0 %805
        %v807 = vsel %vm373, %v787, 0.0
        %808 = vadd.xlane.f32.xlu0 %v807
        %v809 = vpop.xlane.xlu0 %808
        %v810 = vsel %vm373, %v788, 0.0
        %811 = vadd.xlane.f32.xlu0 %v810
        %v812 = vpop.xlane.xlu0 %811
        %v813 = vrcp.pop 64.0
        %v814 = vmul.f32 %v791, %v813
        %v815 = vmul.f32 %v794, %v813
        %v816 = vmul.f32 %v797, %v813
        %v817 = vmul.f32 %v800, %v813
        %v818 = vmul.f32 %v803, %v813
        %v819 = vmul.f32 %v806, %v813
        %v820 = vmul.f32 %v809, %v813
        %v821 = vmul.f32 %v812, %v813
        %v822 = vadd.f32 %v814, 1e-06
        %v823 = vadd.f32 %v815, 1e-06
        %v824 = vadd.f32 %v816, 1e-06
        %v825 = vadd.f32 %v817, 1e-06
        %v826 = vadd.f32 %v818, 1e-06
        %v827 = vadd.f32 %v819, 1e-06
        %v828 = vadd.f32 %v820, 1e-06
        %v829 = vadd.f32 %v821, 1e-06
        %v830 = vrsqrt.pop %v822
        %v831 = vrsqrt.pop %v823
        %v832 = vrsqrt.pop %v824
        %v833 = vrsqrt.pop %v825
        %v834 = vrsqrt.pop %v826
        %v835 = vrsqrt.pop %v827
        %v836 = vrsqrt.pop %v828
        %v837 = vrsqrt.pop %v829
        %v838 = vmul.f32 %v751, %v830
        %v839 = vmul.f32 %v754, %v831
        %v840 = vmul.f32 %v759, %v832
        %v841 = vmul.f32 %v762, %v833
        %v842 = vmul.f32 %v767, %v834
        %v843 = vmul.f32 %v770, %v835
        %v844 = vmul.f32 %v775, %v836
        %v845 = vmul.f32 %v778, %v837
        %v846 = vld [vmem:[%s6] sm:$0x1]
        %v848 = vlaneseq
        %v849 = vshrl.u32 %v848, 7
        %v850 = vsub.s32 0, %v849
        %v851 = vrot.slane %v846, %v850
        %v853 = vmul.f32 %v838, %v851
        %v854 = vmul.f32 %v839, %v851
        %v855 = vmul.f32 %v840, %v851
        %v856 = vmul.f32 %v841, %v851
        %v857 = vmul.f32 %v842, %v851
        %v858 = vmul.f32 %v843, %v851
        %v859 = vmul.f32 %v844, %v851
        %v860 = vmul.f32 %v845, %v851
        %861 = vst.msk [vmem:[%s311] sm:$0xff] %vm373, %v853
        %862 = vst.msk [vmem:[%s311 + $0x8] sm:$0xff] %vm373, %v854
        %863 = vst.msk [vmem:[%s311 + $0x10] sm:$0xff] %vm373, %v855
        %864 = vst.msk [vmem:[%s311 + $0x18] sm:$0xff] %vm373, %v856
        %865 = vst.msk [vmem:[%s311 + $0x20] sm:$0xff] %vm373, %v857
        %866 = vst.msk [vmem:[%s311 + $0x28] sm:$0xff] %vm373, %v858
        %867 = vst.msk [vmem:[%s311 + $0x30] sm:$0xff] %vm373, %v859
        %868 = vst.msk [vmem:[%s311 + $0x38] sm:$0xff] %vm373, %v860
        %s869 = sand.u32 %s185, 1
        %s870 = scalar_lea.sflag [#allocation4], %s869
        %s871 = sand.u32 %s185, 1
        %s872 = smul.addr %s871, 64
        %s873 = scalar_lea.vmem [#allocation7], %s872
        // Predicated region
        $region57: #{tpu_custom_call.1} parent=47 // pred_check
          %p874 = pneg %p195
        $region58: #{tpu_custom_call.1} parent=47 // pred_check_branch
          %876 = sbr.rel (%p874) target = $region60
        $region59: #{tpu_custom_call.1} parent=47 // pred_region
          %s878 = ssub.s32 1024, 1024
          %879 = vsyncadd %s870, %s878
          %s880 = smul.addr %s25, 8
          %s881 = smul.addr %s880, 128
          %s882 = scalar_lea.hbm %s7, %s881
          %s883 = sshll.u32 %s873, 4
          %s884 = int_to_ptr.vmem [resolvable:$true] %s883
          %889 = dma.vmem_to_hbm [thread:$0]  %s884, 1024, %s882, %s870, 128, 128, 8
        $region60: #{tpu_custom_call.1} parent=47 // pred_fallthru
          _
      $region48: #{tpu_custom_call.1} parent=5 // pred_fallthru
        _
      %p890 = scmp.le.s32.totalorder 2, %s20
      // Predicated region
      $region61: #{tpu_custom_call.1} parent=5 // pred_check
        %p891 = pneg %p890
      $region62: #{tpu_custom_call.1} parent=5 // pred_check_branch
        %893 = sbr.rel (%p891) target = $region64
      $region63: #{tpu_custom_call.1} parent=5 // pred_region
        %s894 = ssub.s32 %s20, 2
        // Predicated region
        $region65: #{tpu_custom_call.1} parent=63 // pred_check
          %p895 = pneg %p201
        $region66: #{tpu_custom_call.1} parent=63 // pred_check_branch
          %897 = sbr.rel (%p895) target = $region68
        $region67: #{tpu_custom_call.1} parent=63 // pred_region
          %s898 = sand.u32 %s186, 1
          %s899 = scalar_lea.sflag [#allocation4], %s898
          %s900 = sand.u32 %s186, 1
          %s901 = smul.addr %s900, 64
          %s902 = scalar_lea.vmem [#allocation7], %s901
          %903 = dma.done %s899, 1024
        $region68: #{tpu_custom_call.1} parent=63 // pred_fallthru
          _
      $region64: #{tpu_custom_call.1} parent=5 // pred_fallthru
        _
    $region6: #{tpu_custom_call.1} parent=1 // loop_footer
      %s24 = sadd.s32 1, %s20
    $region7: #{tpu_custom_call.1} parent=1 // loop_footer_branch
      %19 = sbr.rel target = $region3
    $region8: #{tpu_custom_call.1} parent=1 // loop_exit
      _
    %904 = vsyncpa [#allocation3], 1
    %s905 = scalar_lea.sflag [#allocation3], 1
    %906 = vsyncpa %s905, 1
    %907 = vsyncpa [#allocation6], 1
    %908 = vsyncpa [#allocation4], 1
    %s909 = scalar_lea.sflag [#allocation4], 1
    %910 = vsyncpa %s909, 1

</llo_original>
